<compile_context>
chip_gen: v7x
topology: tpu7x:2x2x1
jax: 0.10.0
libtpu: 0.0.40
codegen_flags: <defaults>
</compile_context>

<pallas_src>
import jax
import jax.numpy as jnp
from jax.experimental import pallas as pl
from jax.experimental.pallas import tpu as pltpu


def _round_up(x, m):
    return (x + m - 1) // m * m


def _cdiv(a, b):
    return (a + b - 1) // b


def _vmem_capacity_bytes():
    """Physical VMEM per core; conservative 64 MiB (v7x) if query fails."""
    try:
        info = pltpu.get_tpu_info()
        cap = getattr(info, "vmem_capacity_bytes", None)
        if cap:
            return int(cap)
    except Exception:
        pass
    return 64 << 20


def _vmem_bytes(tm, d_in, d_hid, d_out, x_itemsize, out_itemsize):
    """Estimated VMEM footprint; all inputs double-buffered by Pallas."""
    return (
        2 * tm * d_in * x_itemsize              # x tiles (double-buffered)
        + 2 * tm * d_out * out_itemsize         # out tiles (double-buffered)
        + 2 * 2 * (d_in * d_hid + d_hid * d_out)  # bf16 weights, double-buffered
        + 2 * 4 * (d_hid + d_out)               # f32 biases, double-buffered
        + tm * (d_in * 2 + d_hid * 4 + d_out * 4)  # in-kernel temporaries
    )


def prenet_kernel(x_ref, w1_ref, b1_ref, w2_ref, b2_ref, o_ref):
    # hidden = relu(x @ W1 + b1); cast x to bf16 in-kernel (VPU), f32 accumulate.
    x = x_ref[...].astype(w1_ref.dtype)
    h = jnp.dot(x, w1_ref[...], preferred_element_type=jnp.float32)
    h = jnp.maximum(h + b1_ref[...], 0.0)                  # (tm,H) + (1,H) bcast
    # out = relu(h @ W2 + b2)
    y = jnp.dot(h.astype(w2_ref.dtype), w2_ref[...],
                preferred_element_type=jnp.float32)
    y = jnp.maximum(y + b2_ref[...], 0.0)
    o_ref[...] = y.astype(o_ref.dtype)


def prepare_params(w1, b1, w2, b2, compute_dtype=jnp.bfloat16):
    """One-time parameter prep (hoisted out of the per-call forward path)."""
    return (w1.astype(compute_dtype), b1.astype(jnp.float32),
            w2.astype(compute_dtype), b2.astype(jnp.float32))


def prenet_forward(x, w1, b1, w2, b2, *, tm=512):
    """x: (B, S, D_in) -> (B, S, D_out). Fused 2-layer MLP + ReLU (eval mode).

    w1: (D_in, D_hid), w2: (D_hid, D_out) — already in compute dtype (bf16);
    b1/b2: f32 vectors (see prepare_params).
    """
    B, S, D_in = x.shape
    D_hid = w1.shape[1]
    D_out = w2.shape[1]
    M = B * S
    out_dtype = x.dtype
    x_item = jnp.dtype(x.dtype).itemsize
    out_item = jnp.dtype(out_dtype).itemsize

    # ---- choose row tile -------------------------------------------------
    # Enough work -> at least 2 grid steps so "parallel" can use both TCs on
    # v7x; tiles are multiples of 8 rows unless a single full-extent tile.
    if M >= 256 or M > tm:
        n_tiles = max(_cdiv(M, tm), 2)
        tm_eff = _round_up(_cdiv(M, n_tiles), 8)
    else:
        tm_eff = M                                   # single full-extent tile

    # Shrink the tile if the VMEM budget would be exceeded.
    vmem_cap = _vmem_capacity_bytes()
    budget_cap = int(vmem_cap * 0.75)
    while (tm_eff > 8
           and _vmem_bytes(tm_eff, D_in, D_hid, D_out, x_item, out_item)
           > budget_cap):
        tm_eff = max(8, _round_up(tm_eff // 2, 8))

    M_pad = _round_up(M, tm_eff)
    grid = (M_pad // tm_eff,)

    vmem_need = _vmem_bytes(tm_eff, D_in, D_hid, D_out, x_item, out_item)
    vmem_limit = int(min(max(int(vmem_need * 1.25), 16 << 20), budget_cap))

    # ---- wrapper data movement: only pad rows if the tiling requires it ---
    x2d = x.reshape(M, D_in)                              # metadata-only
    if M_pad != M:
        x2d = jnp.pad(x2d, ((0, M_pad - M), (0, 0)))

    b1_2d = b1.reshape(1, D_hid)                          # metadata-only
    b2_2d = b2.reshape(1, D_out)

    out = pl.pallas_call(
        prenet_kernel,
        out_shape=jax.ShapeDtypeStruct((M_pad, D_out), out_dtype),
        grid_spec=pltpu.PrefetchScalarGridSpec(
            num_scalar_prefetch=0,
            grid=grid,
            in_specs=[
                pl.BlockSpec((tm_eff, D_in), lambda i: (i, 0)),   # x row tile
                pl.BlockSpec((D_in, D_hid), lambda i: (0, 0)),    # W1 (resident)
                pl.BlockSpec((1, D_hid), lambda i: (0, 0)),       # b1
                pl.BlockSpec((D_hid, D_out), lambda i: (0, 0)),   # W2 (resident)
                pl.BlockSpec((1, D_out), lambda i: (0, 0)),       # b2
            ],
            out_specs=pl.BlockSpec((tm_eff, D_out), lambda i: (i, 0)),
        ),
        compiler_params=pltpu.CompilerParams(
            dimension_semantics=("parallel",),
            vmem_limit_bytes=vmem_limit),
    )(x2d, w1, b1_2d, w2, b2_2d)

    if M_pad != M:
        out = out[:M]
    return out.reshape(B, S, D_out)


def init_params(key, dim_input, dim_hidden, dim_output, dtype=jnp.float32):
    """Deterministic init mimicking nn.Linear's uniform(-1/sqrt(fan_in), ...)."""
    k1, k2, k3, k4 = jax.random.split(key, 4)
    lim1 = 1.0 / (dim_input ** 0.5)
    lim2 = 1.0 / (dim_hidden ** 0.5)
    # PyTorch stores weight as (out, in) and computes x @ W.T; we store the
    # transposed layout (in, out) directly so the kernel does x @ W.
    w1 = jax.random.uniform(k1, (dim_input, dim_hidden), dtype, -lim1, lim1)
    b1 = jax.random.uniform(k2, (dim_hidden,), dtype, -lim1, lim1)
    w2 = jax.random.uniform(k3, (dim_hidden, dim_output), dtype, -lim2, lim2)
    b2 = jax.random.uniform(k4, (dim_output,), dtype, -lim2, lim2)
    return w1, b1, w2, b2


if __name__ == "__main__":
    key = jax.random.PRNGKey(0)
    kx, kp = jax.random.split(key)

    batch, seq = 2, 8
    dim_input, dim_hidden, dim_output = 32, 64, 32

    x = jax.random.normal(kx, (batch, seq, dim_input), jnp.float32)
    w1, b1, w2, b2 = init_params(kp, dim_input, dim_hidden, dim_output)

    # One-time parameter preparation (bf16 weights, f32 biases).
    w1c, b1c, w2c, b2c = prepare_params(w1, b1, w2, b2)

    out = jax.jit(prenet_forward)(x, w1c, b1c, w2c, b2c)
    out = jax.block_until_ready(out)

    # Reference (plain JAX, eval-mode PreNet) matching the kernel's
    # bf16-input / f32-accumulate numerics.
    xb = x.reshape(-1, dim_input).astype(jnp.bfloat16).astype(jnp.float32)
    w1b = w1.astype(jnp.bfloat16).astype(jnp.float32)
    w2b = w2.astype(jnp.bfloat16).astype(jnp.float32)
    h_ref = jnp.maximum(xb @ w1b + b1, 0.0)
    h_ref = h_ref.astype(jnp.bfloat16).astype(jnp.float32)
    y_ref = jnp.maximum(h_ref @ w2b + b2, 0.0).reshape(batch, seq, dim_output)

    assert out.shape == (batch, seq, dim_output)
    assert jnp.allclose(out.astype(jnp.float32), y_ref, atol=1e-2, rtol=1e-2), (
        float(jnp.max(jnp.abs(out.astype(jnp.float32) - y_ref))))

    print("KERNEL_OK")
</pallas_src>

<mosaic_0001>
module attributes {stable_mosaic.version = 11 : i64} {
  func.func @prenet_kernel(%arg0: i32, %arg1: memref<16x32xf32, #tpu.memory_space<vmem>>, %arg2: memref<32x64xbf16, #tpu.memory_space<vmem>>, %arg3: memref<1x64xf32, #tpu.memory_space<vmem>>, %arg4: memref<64x32xbf16, #tpu.memory_space<vmem>>, %arg5: memref<1x32xf32, #tpu.memory_space<vmem>>, %arg6: memref<16x32xf32, #tpu.memory_space<vmem>>) attributes {dimension_semantics = [#tpu.dimension_semantics<parallel>], iteration_bounds = array<i64: 1>, scalar_prefetch = 0 : i64, scratch_operands = 0 : i64, tpu.core_type = #tpu.core_type<tc>, window_params = [{transform_indices = @transform_0, window_bounds = array<i64: 16, 32>}, {pipeline_mode = #tpu.pipeline_mode<synchronous>, transform_indices = @transform_1, window_bounds = array<i64: 32, 64>}, {pipeline_mode = #tpu.pipeline_mode<synchronous>, transform_indices = @transform_2, window_bounds = array<i64: 1, 64>}, {pipeline_mode = #tpu.pipeline_mode<synchronous>, transform_indices = @transform_3, window_bounds = array<i64: 64, 32>}, {pipeline_mode = #tpu.pipeline_mode<synchronous>, transform_indices = @transform_4, window_bounds = array<i64: 1, 32>}, {transform_indices = @transform_5, window_bounds = array<i64: 16, 32>}]} {
    %c0 = arith.constant 0 : index
    %c0_0 = arith.constant 0 : index
    %0 = vector.load %arg1[%c0, %c0_0] : memref<16x32xf32, #tpu.memory_space<vmem>>, vector<16x32xf32>
    %1 = arith.truncf %0 : vector<16x32xf32> to vector<16x32xbf16>
    %c0_1 = arith.constant 0 : index
    %c0_2 = arith.constant 0 : index
    %2 = vector.load %arg2[%c0_1, %c0_2] : memref<32x64xbf16, #tpu.memory_space<vmem>>, vector<32x64xbf16>
    %cst = arith.constant dense<0.000000e+00> : vector<16x64xf32>
    %3 = tpu.matmul %1, %2, %cst {dimension_numbers = #tpu.dot_dimension_numbers<[1], [0], [0], [1], [0, 0, 1, 1], [], []>} : vector<16x32xbf16>, vector<32x64xbf16>, vector<16x64xf32> -> vector<16x64xf32>
    %c0_3 = arith.constant 0 : index
    %c0_4 = arith.constant 0 : index
    %4 = vector.load %arg3[%c0_3, %c0_4] : memref<1x64xf32, #tpu.memory_space<vmem>>, vector<1x64xf32>
    %5 = vector.broadcast %4 : vector<1x64xf32> to vector<16x64xf32>
    %6 = arith.addf %3, %5 : vector<16x64xf32>
    %cst_5 = arith.constant 0.000000e+00 : f32
    %7 = vector.broadcast %cst_5 : f32 to vector<16x64xf32>
    %8 = arith.maximumf %6, %7 : vector<16x64xf32>
    %9 = arith.truncf %8 : vector<16x64xf32> to vector<16x64xbf16>
    %c0_6 = arith.constant 0 : index
    %c0_7 = arith.constant 0 : index
    %10 = vector.load %arg4[%c0_6, %c0_7] : memref<64x32xbf16, #tpu.memory_space<vmem>>, vector<64x32xbf16>
    %cst_8 = arith.constant dense<0.000000e+00> : vector<16x32xf32>
    %11 = tpu.matmul %9, %10, %cst_8 {dimension_numbers = #tpu.dot_dimension_numbers<[1], [0], [0], [1], [0, 0, 1, 1], [], []>} : vector<16x64xbf16>, vector<64x32xbf16>, vector<16x32xf32> -> vector<16x32xf32>
    %c0_9 = arith.constant 0 : index
    %c0_10 = arith.constant 0 : index
    %12 = vector.load %arg5[%c0_9, %c0_10] : memref<1x32xf32, #tpu.memory_space<vmem>>, vector<1x32xf32>
    %13 = vector.broadcast %12 : vector<1x32xf32> to vector<16x32xf32>
    %14 = arith.addf %11, %13 : vector<16x32xf32>
    %cst_11 = arith.constant 0.000000e+00 : f32
    %15 = vector.broadcast %cst_11 : f32 to vector<16x32xf32>
    %16 = arith.maximumf %14, %15 : vector<16x32xf32>
    %c0_12 = arith.constant 0 : index
    %c0_13 = arith.constant 0 : index
    %17 = vector.load %arg6[%c0_12, %c0_13] : memref<16x32xf32, #tpu.memory_space<vmem>>, vector<16x32xf32>
    tpu.vector_store %arg6[%c0_12, %c0_13], %16 {strides = array<i32>} : memref<16x32xf32, #tpu.memory_space<vmem>>, vector<16x32xf32>,
    return
  }
  func.func @transform_0(%arg0: i32) -> (i32, i32) {
    %c0_i32 = arith.constant 0 : i32
    %c0_i32_0 = arith.constant 0 : i32
    return %arg0, %c0_i32 : i32, i32
  }
  func.func @transform_1(%arg0: i32) -> (i32, i32) {
    %c0_i32 = arith.constant 0 : i32
    %c0_i32_0 = arith.constant 0 : i32
    %c0_i32_1 = arith.constant 0 : i32
    return %c0_i32, %c0_i32_0 : i32, i32
  }
  func.func @transform_2(%arg0: i32) -> (i32, i32) {
    %c0_i32 = arith.constant 0 : i32
    %c0_i32_0 = arith.constant 0 : i32
    %c0_i32_1 = arith.constant 0 : i32
    return %c0_i32, %c0_i32_0 : i32, i32
  }
  func.func @transform_3(%arg0: i32) -> (i32, i32) {
    %c0_i32 = arith.constant 0 : i32
    %c0_i32_0 = arith.constant 0 : i32
    %c0_i32_1 = arith.constant 0 : i32
    return %c0_i32, %c0_i32_0 : i32, i32
  }
  func.func @transform_4(%arg0: i32) -> (i32, i32) {
    %c0_i32 = arith.constant 0 : i32
    %c0_i32_0 = arith.constant 0 : i32
    %c0_i32_1 = arith.constant 0 : i32
    return %c0_i32, %c0_i32_0 : i32, i32
  }
  func.func @transform_5(%arg0: i32) -> (i32, i32) {
    %c0_i32 = arith.constant 0 : i32
    %c0_i32_0 = arith.constant 0 : i32
    return %arg0, %c0_i32 : i32, i32
  }
}

</mosaic_0001>

<llo_original>
// kernel: prenet_forward.1
$region0: #{prenet_forward.1}
  #allocation0 [shape = 'u32[]', space=smem, size = 0x4, offset = 0x4, fixed_abs, tag = 'smem constant byte address 0x4 - core index']
  #allocation1 [shape = 'u32[144,128]{1,0:T(1,128)}', space=vmem, size = 0x12000, scoped, tag = 'internal scratch']
  %s0 = inlined_call_operand.vmem [shape: f32[16,32], index: 0, kind: input, shape index: {}]
  %s1 = inlined_call_operand.vmem [shape: bf16[32,64], index: 1, kind: input, shape index: {}]
  %s2 = inlined_call_operand.vmem [shape: f32[1,64], index: 2, kind: input, shape index: {}]
  %s3 = inlined_call_operand.vmem [shape: bf16[64,32], index: 3, kind: input, shape index: {}]
  %s4 = inlined_call_operand.vmem [shape: f32[1,32], index: 4, kind: input, shape index: {}]
  %s5 = inlined_call_operand.hbm [shape: f32[16,32], index: 5, kind: output, shape index: {}]
  %s6 = sld [smem:[#allocation0]]
  $region30: #{prenet_forward.1} parent=0
    _
  %s8 = ssub.s32 1, %s6
  %s9 = scalar_select 0, %s8, %s6
  $region1: #{prenet_forward.1} parent=0
    #allocation2 [shape = 'u8[8192]{0}', space=vmem, size = 0x2000, scoped, tag = 'output window, operand 0, single buffered']
    #allocation3 [shape = 's32[1]{0}', space=sflag, size = 0x4, scoped, tag = 'scoped memory for prenet_forward.1']
    %10 = vsyncpa [#allocation3], 0
    // Predicated region
    $region2: #{prenet_forward.1} parent=1 // pred_check
      _
    $region3: #{prenet_forward.1} parent=1 // pred_check_branch
      %12 = sbr.rel (0) target = $region5
    $region4: #{prenet_forward.1} parent=1 // pred_region
      _
    $region5: #{prenet_forward.1} parent=1 // pred_fallthru
      _
    // Predicated region
    $region6: #{prenet_forward.1} parent=1 // pred_check
      _
    $region7: #{prenet_forward.1} parent=1 // pred_check_branch
      %14 = sbr.rel (0) target = $region9
    $region8: #{prenet_forward.1} parent=1 // pred_region
      _
    $region9: #{prenet_forward.1} parent=1 // pred_fallthru
      _
    // Predicated region
    $region10: #{prenet_forward.1} parent=1 // pred_check
      _
    $region11: #{prenet_forward.1} parent=1 // pred_check_branch
      %16 = sbr.rel (0) target = $region13
    $region12: #{prenet_forward.1} parent=1 // pred_region
      _
    $region13: #{prenet_forward.1} parent=1 // pred_fallthru
      _
    // Predicated region
    $region14: #{prenet_forward.1} parent=1 // pred_check
      _
    $region15: #{prenet_forward.1} parent=1 // pred_check_branch
      %18 = sbr.rel (0) target = $region17
    $region16: #{prenet_forward.1} parent=1 // pred_region
      _
    $region17: #{prenet_forward.1} parent=1 // pred_fallthru
      _
    // Predicated region
    $region18: #{prenet_forward.1} parent=1 // pred_check
      _
    $region19: #{prenet_forward.1} parent=1 // pred_check_branch
      %20 = sbr.rel (0) target = $region21
    $region20: #{prenet_forward.1} parent=1 // pred_region
      _
    $region21: #{prenet_forward.1} parent=1 // pred_fallthru
      _
    %v22 = vld [vmem:[%s0] sm:$0xff]
    %v23 = vld [vmem:[%s0 + $0x8] sm:$0xff]
    %v24 = vpack.c.bf16 %v23, %v22
    %v25 = vld [vmem:[%s1] sm:$0xf]
    %v26 = vld [vmem:[%s1 + $0x4] sm:$0xf]
    %v27 = vld [vmem:[%s1 + $0x8] sm:$0xf]
    %v28 = vld [vmem:[%s1 + $0xc] sm:$0xf]
    %v29 = vld [vmem:[%s2] sm:$0x1]
    %v31 = vlaneseq
    %v32 = vshrl.u32 %v31, 7
    %v33 = vsub.s32 0, %v32
    %v34 = vrot.slane %v29, %v33
    %v40 = vunpack.c.l.b16 %v25
    %v41 = vunpack.c.l.b16 %v26
    %v42 = vunpack.c.l.b16 %v27
    %v43 = vunpack.c.l.b16 %v28
    %v44 = vpack.c.b16 %v41, %v40
    %v45 = vpack.c.b16 %v43, %v42
    %vm48 = vcmask 261120
    %v50 = vsel %vm48, %v24, 0
    %52 = vmatprep.subr.bf16.mxu0 0
    %53 = vmatpush1.bf16.msra.mxu0 %v44
    %54 = vmatprep.subr.bf16.mxu0 0
    %55 = vmatpush1.bf16.msra.mxu0 %v45
    %56 = vmatprep.subr.bf16.mxu0 0
    %57 = vmatpush1.bf16.msra.mxu0 0
    %58 = vmatprep.subr.bf16.mxu0 0
    %59 = vmatpush1.bf16.msra.mxu0 0
    %60 = vmatprep.subr.bf16.mxu0 0
    %61 = vmatpush1.bf16.msra.mxu0 0
    %62 = vmatprep.subr.bf16.mxu0 0
    %63 = vmatpush1.bf16.msra.mxu0 0
    %64 = vmatprep.subr.bf16.mxu0 0
    %65 = vmatpush1.bf16.msra.mxu0 0
    %66 = vmatprep.subr.bf16.mxu0 0
    %67 = vmatpush1.bf16.msra.mxu0 0
    %68 = vmatprep.subr.bf16.mxu0 0
    %69 = vmatpush1.bf16.msra.mxu0 0
    %70 = vmatprep.subr.bf16.mxu0 0
    %71 = vmatpush1.bf16.msra.mxu0 0
    %72 = vmatprep.subr.bf16.mxu0 0
    %73 = vmatpush1.bf16.msra.mxu0 0
    %74 = vmatprep.subr.bf16.mxu0 0
    %75 = vmatpush1.bf16.msra.mxu0 0
    %76 = vmatprep.subr.bf16.mxu0 0
    %77 = vmatpush1.bf16.msra.mxu0 0
    %78 = vmatprep.subr.bf16.mxu0 0
    %79 = vmatpush1.bf16.msra.mxu0 0
    %80 = vmatprep.subr.bf16.mxu0 0
    %81 = vmatpush1.bf16.msra.mxu0 0
    %82 = vmatprep.subr.bf16.mxu0 0
    %83 = vmatpush1.bf16.msra.mxu0 0
    %84 = vmatprep.mubr.bf16.mxu0 0
    %85 = vmatmul.mubr.bf16.gmra.mrb[0].mxu0 %v50
    %v86 = vpop.f32.mrb[0].mxu0
    %v87 = vadd.f32 %v34, %v86
    %v88 = vpop.f32.mrb[0].mxu0
    %v89 = vpop.f32.mrb[0].mxu0
    %v90 = vadd.f32 %v34, %v89
    %v91 = vpop.f32.mrb[0].mxu0
    %92 = vdwg.mxu0
    %v93 = vmax.f32 %v87, 0.0
    %v94 = vmax.f32 %v90, 0.0
    %v95 = vpack.c.bf16 %v94, %v93
    %v96 = vld [vmem:[%s3] sm:$0xf]
    %v97 = vld [vmem:[%s3 + $0x4] sm:$0xf]
    %v98 = vld [vmem:[%s3 + $0x8] sm:$0xf]
    %v99 = vld [vmem:[%s3 + $0xc] sm:$0xf]
    %v100 = vld [vmem:[%s3 + $0x10] sm:$0xf]
    %v101 = vld [vmem:[%s3 + $0x14] sm:$0xf]
    %v102 = vld [vmem:[%s3 + $0x18] sm:$0xf]
    %v103 = vld [vmem:[%s3 + $0x1c] sm:$0xf]
    %v104 = vld [vmem:[%s4] sm:$0x1]
    %v106 = vlaneseq
    %v107 = vshrl.u32 %v106, 7
    %v108 = vsub.s32 0, %v107
    %v109 = vrot.slane %v104, %v108
    %v119 = vunpack.c.l.b16 %v96
    %v120 = vunpack.c.l.b16 %v97
    %v121 = vunpack.c.l.b16 %v98
    %v122 = vunpack.c.l.b16 %v99
    %v123 = vunpack.c.l.b16 %v100
    %v124 = vunpack.c.l.b16 %v101
    %v125 = vunpack.c.l.b16 %v102
    %v126 = vunpack.c.l.b16 %v103
    %v127 = vpack.c.b16 %v120, %v119
    %v128 = vpack.c.b16 %v122, %v121
    %v129 = vpack.c.b16 %v124, %v123
    %v130 = vpack.c.b16 %v126, %v125
    %vm135 = vcmask 523264
    %v137 = vsel %vm135, %v95, 0
    %139 = vmatprep.subr.bf16.mxu0 0
    %140 = vmatpush1.bf16.msra.mxu0 %v127
    %141 = vmatprep.subr.bf16.mxu0 0
    %142 = vmatpush1.bf16.msra.mxu0 %v128
    %143 = vmatprep.subr.bf16.mxu0 0
    %144 = vmatpush1.bf16.msra.mxu0 %v129
    %145 = vmatprep.subr.bf16.mxu0 0
    %146 = vmatpush1.bf16.msra.mxu0 %v130
    %147 = vmatprep.subr.bf16.mxu0 0
    %148 = vmatpush1.bf16.msra.mxu0 0
    %149 = vmatprep.subr.bf16.mxu0 0
    %150 = vmatpush1.bf16.msra.mxu0 0
    %151 = vmatprep.subr.bf16.mxu0 0
    %152 = vmatpush1.bf16.msra.mxu0 0
    %153 = vmatprep.subr.bf16.mxu0 0
    %154 = vmatpush1.bf16.msra.mxu0 0
    %155 = vmatprep.subr.bf16.mxu0 0
    %156 = vmatpush1.bf16.msra.mxu0 0
    %157 = vmatprep.subr.bf16.mxu0 0
    %158 = vmatpush1.bf16.msra.mxu0 0
    %159 = vmatprep.subr.bf16.mxu0 0
    %160 = vmatpush1.bf16.msra.mxu0 0
    %161 = vmatprep.subr.bf16.mxu0 0
    %162 = vmatpush1.bf16.msra.mxu0 0
    %163 = vmatprep.subr.bf16.mxu0 0
    %164 = vmatpush1.bf16.msra.mxu0 0
    %165 = vmatprep.subr.bf16.mxu0 0
    %166 = vmatpush1.bf16.msra.mxu0 0
    %167 = vmatprep.subr.bf16.mxu0 0
    %168 = vmatpush1.bf16.msra.mxu0 0
    %169 = vmatprep.subr.bf16.mxu0 0
    %170 = vmatpush1.bf16.msra.mxu0 0
    %171 = vmatprep.mubr.bf16.mxu0 0
    %172 = vmatmul.mubr.bf16.gmra.mrb[0].mxu0 %v137
    %v173 = vpop.f32.mrb[0].mxu0
    %v174 = vadd.f32 %v109, %v173
    %v175 = vpop.f32.mrb[0].mxu0
    %v176 = vpop.f32.mrb[0].mxu0
    %v177 = vadd.f32 %v109, %v176
    %v178 = vpop.f32.mrb[0].mxu0
    %179 = vdwg.mxu0
    %v180 = vmax.f32 %v174, 0.0
    %v181 = vmax.f32 %v177, 0.0
    %182 = vst.msk [vmem:[#allocation2] sm:$0xff] %vm48, %v180
    %183 = vst.msk [vmem:[#allocation2 + $0x8] sm:$0xff] %vm48, %v181
    // Predicated region
    $region22: #{prenet_forward.1} parent=1 // pred_check
      _
    $region23: #{prenet_forward.1} parent=1 // pred_check_branch
      %185 = sbr.rel (0) target = $region25
    $region24: #{prenet_forward.1} parent=1 // pred_region
      %s187 = ssub.s32 256, 256
      %188 = vsyncadd [#allocation3], %s187
      %s189 = sshll.u32 [#allocation2], 4
      %s190 = int_to_ptr.vmem [resolvable:$true] %s189
      %195 = dma.vmem_to_hbm [thread:$0]  %s190, 256, %s5, [#allocation3], 128, 128, 8
    $region25: #{prenet_forward.1} parent=1 // pred_fallthru
      _
    // Predicated region
    $region26: #{prenet_forward.1} parent=1 // pred_check
      _
    $region27: #{prenet_forward.1} parent=1 // pred_check_branch
      %197 = sbr.rel (0) target = $region29
    $region28: #{prenet_forward.1} parent=1 // pred_region
      %198 = dma.done [#allocation3], 256
    $region29: #{prenet_forward.1} parent=1 // pred_fallthru
      _
    %199 = vsyncpa [#allocation3], 1

</llo_original>
